<compile_context>
chip_gen: v6e
topology: v6e:2x2x1
jax: 0.10.0
libtpu: 0.0.40
codegen_flags: <defaults>
</compile_context>

<pallas_src>
import jax
import jax.numpy as jnp
from jax.experimental import pallas as pl
from jax.experimental.pallas import tpu as pltpu

_LANES = 512  # lane width of the flattened slab (multiple of 128)


def _fusion_kernel(lam_ref, x_ref, y_ref, o_ref):
    # lam stays f32 (matches the torch f32 parameter); compute in f32 and cast.
    lam = lam_ref[0]
    x = x_ref[...].astype(jnp.float32)
    y = y_ref[...].astype(jnp.float32)
    o_ref[...] = (lam * x + y).astype(o_ref.dtype)


def _choose_rows_block(rows, itemsize):
    # Sublane packing: f32 -> 8, bf16 -> 16, int8/fp8 -> 32.
    sub = max(8, 32 // itemsize)
    # Target ~1 MiB tiles: 3 arrays x 2 pipeline buffers x 1 MiB = 6 MiB in
    # flight, safe under v5e's 16 MiB / v7x's 32 MiB scoped defaults while
    # large enough to hide the ~0.35 us per-grid-step overhead.
    target = max(sub, ((1 << 20) // (_LANES * itemsize) // sub) * sub)
    if rows <= target:
        # Single row-block equal to the full extent (always a legal block).
        return rows
    return target


def fusion(lam, x, y):
    """lam: scalar float; x, y: broadcast-compatible arrays (NCHW in the model)."""
    # Broadcast like the original nn.Module (lam * x + y).
    x, y = jnp.broadcast_arrays(x, y)
    out_dtype = jnp.result_type(x.dtype, y.dtype)
    x = x.astype(out_dtype)
    y = y.astype(out_dtype)

    orig_shape = x.shape
    n = x.size
    itemsize = jnp.dtype(out_dtype).itemsize

    rows = pl.cdiv(n, _LANES)
    bm = _choose_rows_block(rows, itemsize)
    m = pl.cdiv(rows, bm) * bm          # rows padded to a multiple of the block
    n_pad = m * _LANES

    xf = x.reshape(-1)
    yf = y.reshape(-1)
    if n_pad != n:
        pad = n_pad - n
        xf = jnp.pad(xf, (0, pad))
        yf = jnp.pad(yf, (0, pad))
    x2 = xf.reshape(m, _LANES)
    y2 = yf.reshape(m, _LANES)

    lam_arr = jnp.asarray(lam, dtype=jnp.float32).reshape((1,))

    # Explicit VMEM budget: 3 streams x 2 buffers x tile + headroom.
    tile_bytes = bm * _LANES * itemsize
    vmem_limit = int(min(max(6 * tile_bytes + (4 << 20), 16 << 20), 48 << 20))

    out2 = pl.pallas_call(
        _fusion_kernel,
        out_shape=jax.ShapeDtypeStruct((m, _LANES), out_dtype),
        grid_spec=pl.GridSpec(
            grid=(m // bm,),
            in_specs=[
                pl.BlockSpec(memory_space=pltpu.SMEM),              # lam (f32 scalar)
                pl.BlockSpec((bm, _LANES), lambda i: (i, 0)),       # x tile
                pl.BlockSpec((bm, _LANES), lambda i: (i, 0)),       # y tile
            ],
            out_specs=pl.BlockSpec((bm, _LANES), lambda i: (i, 0)),
        ),
        compiler_params=pltpu.CompilerParams(
            dimension_semantics=("parallel",),   # row-grid shards across v7x's 2 TCs
            vmem_limit_bytes=vmem_limit,
        ),
    )(lam_arr, x2, y2)

    return out2.reshape(-1)[:n].reshape(orig_shape)


if __name__ == "__main__":
    key = jax.random.PRNGKey(0)
    kx, ky = jax.random.split(key)

    # Small NCHW shapes consistent with the module's forward.
    x = jax.random.normal(kx, (2, 4, 16, 16), dtype=jnp.float32)
    y = jax.random.normal(ky, (2, 4, 16, 16), dtype=jnp.float32)

    # Deterministic parameter init matching nn.Parameter(torch.tensor(1.0)).
    lam = jnp.float32(1.0)

    out = fusion(lam, x, y)
    out = jax.block_until_ready(out)

    # Correctness check against the obvious reference.
    ref = lam * x + y
    assert out.shape == ref.shape and out.dtype == ref.dtype
    assert jnp.allclose(out, ref, atol=1e-6, rtol=1e-6)

    print("KERNEL_OK")
</pallas_src>

<mosaic_0001>
module attributes {stable_mosaic.version = 11 : i64} {
  func.func @_fusion_kernel(%arg0: i32, %arg1: memref<1xf32, #tpu.memory_space<smem>>, %arg2: memref<4x512xf32, #tpu.memory_space<vmem>>, %arg3: memref<4x512xf32, #tpu.memory_space<vmem>>, %arg4: memref<4x512xf32, #tpu.memory_space<vmem>>) attributes {dimension_semantics = [#tpu.dimension_semantics<parallel>], iteration_bounds = array<i64: 1>, scalar_prefetch = 0 : i64, scratch_operands = 0 : i64, tpu.core_type = #tpu.core_type<tc>, window_params = [{transform_indices = @transform_0, window_bounds = array<i64: 1>}, {transform_indices = @transform_1, window_bounds = array<i64: 4, 512>}, {transform_indices = @transform_2, window_bounds = array<i64: 4, 512>}, {transform_indices = @transform_3, window_bounds = array<i64: 4, 512>}]} {
    %c0 = arith.constant 0 : index
    %0 = memref.load %arg1[%c0] : memref<1xf32, #tpu.memory_space<smem>>
    %c0_0 = arith.constant 0 : index
    %c0_1 = arith.constant 0 : index
    %1 = vector.load %arg2[%c0_0, %c0_1] : memref<4x512xf32, #tpu.memory_space<vmem>>, vector<4x512xf32>
    %c0_2 = arith.constant 0 : index
    %c0_3 = arith.constant 0 : index
    %2 = vector.load %arg3[%c0_2, %c0_3] : memref<4x512xf32, #tpu.memory_space<vmem>>, vector<4x512xf32>
    %3 = vector.broadcast %0 : f32 to vector<4x512xf32>
    %4 = arith.mulf %3, %1 : vector<4x512xf32>
    %5 = arith.addf %4, %2 : vector<4x512xf32>
    %c0_4 = arith.constant 0 : index
    %c0_5 = arith.constant 0 : index
    %6 = vector.load %arg4[%c0_4, %c0_5] : memref<4x512xf32, #tpu.memory_space<vmem>>, vector<4x512xf32>
    tpu.vector_store %arg4[%c0_4, %c0_5], %5 {strides = array<i32>} : memref<4x512xf32, #tpu.memory_space<vmem>>, vector<4x512xf32>,
    return
  }
  func.func @transform_0(%arg0: i32) -> i32 {
    %c0_i32 = arith.constant 0 : i32
    %c0_i32_0 = arith.constant 0 : i32
    return %c0_i32 : i32
  }
  func.func @transform_1(%arg0: i32) -> (i32, i32) {
    %c0_i32 = arith.constant 0 : i32
    %c0_i32_0 = arith.constant 0 : i32
    return %arg0, %c0_i32 : i32, i32
  }
  func.func @transform_2(%arg0: i32) -> (i32, i32) {
    %c0_i32 = arith.constant 0 : i32
    %c0_i32_0 = arith.constant 0 : i32
    return %arg0, %c0_i32 : i32, i32
  }
  func.func @transform_3(%arg0: i32) -> (i32, i32) {
    %c0_i32 = arith.constant 0 : i32
    %c0_i32_0 = arith.constant 0 : i32
    return %arg0, %c0_i32 : i32, i32
  }
}

</mosaic_0001>

<llo_original>
// kernel: tpu_custom_call.1
$region0: #{tpu_custom_call.1}
  #allocation0 [shape = 'u32[]', space=smem, size = 0x4, offset = 0x4, fixed_abs, tag = 'smem constant byte address 0x4 - core index']
  #allocation1 [shape = 'u32[144,128]{1,0:T(1,128)}', space=vmem, size = 0x12000, scoped, tag = 'internal scratch']
  #allocation2 [shape = 'f32[1]{0:T(128)S(6)}', space=smem, size = 0x200, scoped, tag = 'scoped memory for tpu_custom_call.1']
  %s0 = inlined_call_operand.<no memory space> [shape: f32[1], index: 0, kind: input, shape index: {}]
  %s1 = inlined_call_operand.hbm [shape: f32[4,512], index: 1, kind: input, shape index: {}]
  %s2 = inlined_call_operand.hbm [shape: f32[4,512], index: 2, kind: input, shape index: {}]
  %s3 = inlined_call_operand.hbm [shape: f32[4,512], index: 3, kind: output, shape index: {}]
  %s4 = sld [smem:[#allocation0]]
  $region30: #{tpu_custom_call.1} parent=0
    _
  %s6 = ssub.s32 1, %s4
  %s7 = scalar_select 0, %s6, %s4
  %8 = sst [smem:[#allocation2]] %s0
  $region1: #{tpu_custom_call.1} parent=0
    #allocation3 [shape = 'u8[8192]{0}', space=vmem, size = 0x2000, scoped, tag = 'input window, operand 1, single buffered']
    #allocation4 [shape = 's32[1]{0}', space=sflag, size = 0x4, scoped, tag = 'scoped memory for tpu_custom_call.1']
    #allocation5 [shape = 's32[1]{0}', space=sflag, size = 0x4, scoped, tag = 'scoped memory for tpu_custom_call.1']
    #allocation6 [shape = 'u8[8192]{0}', space=vmem, size = 0x2000, scoped, tag = 'input window, operand 2, single buffered']
    #allocation7 [shape = 's32[1]{0}', space=sflag, size = 0x4, scoped, tag = 'scoped memory for tpu_custom_call.1']
    #allocation8 [shape = 'u8[8192]{0}', space=vmem, size = 0x2000, scoped, tag = 'output window, operand 0, single buffered']
    %9 = vsyncpa [#allocation4], 0
    %10 = vsyncpa [#allocation7], 0
    %11 = vsyncpa [#allocation5], 0
    // Predicated region
    $region2: #{tpu_custom_call.1} parent=1 // pred_check
      _
    $region3: #{tpu_custom_call.1} parent=1 // pred_check_branch
      %13 = sbr.rel (0) target = $region5
    $region4: #{tpu_custom_call.1} parent=1 // pred_region
      _
    $region5: #{tpu_custom_call.1} parent=1 // pred_fallthru
      _
    // Predicated region
    $region6: #{tpu_custom_call.1} parent=1 // pred_check
      _
    $region7: #{tpu_custom_call.1} parent=1 // pred_check_branch
      %15 = sbr.rel (0) target = $region9
    $region8: #{tpu_custom_call.1} parent=1 // pred_region
      %s17 = ssub.s32 256, 256
      %18 = vsyncadd [#allocation4], %s17
      %s20 = sshll.u32 [#allocation3], 4
      %s21 = int_to_ptr.vmem [resolvable:$true] %s20
      %23 = dma.hbm_to_vmem [thread:$0]  %s1, 256, %s21, [#allocation4]
    $region9: #{tpu_custom_call.1} parent=1 // pred_fallthru
      _
    // Predicated region
    $region10: #{tpu_custom_call.1} parent=1 // pred_check
      _
    $region11: #{tpu_custom_call.1} parent=1 // pred_check_branch
      %25 = sbr.rel (0) target = $region13
    $region12: #{tpu_custom_call.1} parent=1 // pred_region
      %s27 = ssub.s32 256, 256
      %28 = vsyncadd [#allocation7], %s27
      %s30 = sshll.u32 [#allocation6], 4
      %s31 = int_to_ptr.vmem [resolvable:$true] %s30
      %33 = dma.hbm_to_vmem [thread:$0]  %s2, 256, %s31, [#allocation7]
    $region13: #{tpu_custom_call.1} parent=1 // pred_fallthru
      _
    // Predicated region
    $region14: #{tpu_custom_call.1} parent=1 // pred_check
      _
    $region15: #{tpu_custom_call.1} parent=1 // pred_check_branch
      %35 = sbr.rel (0) target = $region17
    $region16: #{tpu_custom_call.1} parent=1 // pred_region
      %36 = dma.done [#allocation4], 256
    $region17: #{tpu_custom_call.1} parent=1 // pred_fallthru
      _
    // Predicated region
    $region18: #{tpu_custom_call.1} parent=1 // pred_check
      _
    $region19: #{tpu_custom_call.1} parent=1 // pred_check_branch
      %38 = sbr.rel (0) target = $region21
    $region20: #{tpu_custom_call.1} parent=1 // pred_region
      %39 = dma.done [#allocation7], 256
    $region21: #{tpu_custom_call.1} parent=1 // pred_fallthru
      _
    %s40 = sld [smem:[#allocation2]]
    %v41 = vld [vmem:[#allocation3] sm:$0xff]
    %v42 = vld [vmem:[#allocation3 + $0x8] sm:$0xff]
    %v43 = vld [vmem:[#allocation6] sm:$0xff]
    %v44 = vld [vmem:[#allocation6 + $0x8] sm:$0xff]
    %v45 = vstv %s40
    %v46 = vmul.f32 %v45, %v41
    %v47 = vmul.f32 %v45, %v42
    %v48 = vadd.f32 %v46, %v43
    %v49 = vadd.f32 %v47, %v44
    %50 = vst [vmem:[#allocation8] sm:$0xff] %v48
    %51 = vst [vmem:[#allocation8 + $0x8] sm:$0xff] %v49
    // Predicated region
    $region22: #{tpu_custom_call.1} parent=1 // pred_check
      _
    $region23: #{tpu_custom_call.1} parent=1 // pred_check_branch
      %53 = sbr.rel (0) target = $region25
    $region24: #{tpu_custom_call.1} parent=1 // pred_region
      %s55 = ssub.s32 256, 256
      %56 = vsyncadd [#allocation5], %s55
      %s58 = sshll.u32 [#allocation8], 4
      %s59 = int_to_ptr.vmem [resolvable:$true] %s58
      %61 = dma.vmem_to_hbm [thread:$0]  %s59, 256, %s3, [#allocation5]
    $region25: #{tpu_custom_call.1} parent=1 // pred_fallthru
      _
    // Predicated region
    $region26: #{tpu_custom_call.1} parent=1 // pred_check
      _
    $region27: #{tpu_custom_call.1} parent=1 // pred_check_branch
      %63 = sbr.rel (0) target = $region29
    $region28: #{tpu_custom_call.1} parent=1 // pred_region
      %64 = dma.done [#allocation5], 256
    $region29: #{tpu_custom_call.1} parent=1 // pred_fallthru
      _
    %65 = vsyncpa [#allocation4], 1
    %66 = vsyncpa [#allocation7], 1
    %67 = vsyncpa [#allocation5], 1

</llo_original>
